<compile_context>
chip_gen: v5e
topology: v5e:2x2
jax: 0.10.0
libtpu: 0.0.40
codegen_flags: <defaults>
</compile_context>

<pallas_src>
import functools

import jax
import jax.numpy as jnp
from jax import lax
from jax.experimental import pallas as pl
from jax.experimental.pallas import tpu as pltpu


def _learned_attention_kernel(
    lens_ref,          # VMEM [TB, 1]      int32 memory lengths
    q_ref,             # VMEM [TB, Q]      queries
    k_ref,             # VMEM [TB*M, K]    keys   (batch-major rows)
    v_ref,             # VMEM [TB*M, K]    values (batch-major rows)
    wk_ref,            # VMEM [K, H]       key_layer.weight.T
    wq_ref,            # VMEM [Q, H]       query_layer.weight.T
    we_ref,            # VMEM [1, H]       energy_layer.weight
    out_ref,           # VMEM [TB, H]      soft value retrieval
    attn_ref,          # VMEM [TB, M]      attention weights (row layout)
):
    tb = q_ref.shape[0]
    rows = k_ref.shape[0]
    m = rows // tb
    h = wk_ref.shape[1]

    keys = k_ref[...]                                   # [rows, K]
    vals = v_ref[...]                                   # [rows, K]
    q = q_ref[...]                                      # [TB, Q]
    wk = wk_ref[...]                                    # [K, H]
    wq = wq_ref[...]                                    # [Q, H]
    we = we_ref[...]                                    # [1, H]

    # Fused key/value projection: one MXU matmul, shared RHS (wk stays loaded).
    kv = jnp.concatenate([keys, vals], axis=0)                        # [2*rows, K]
    pkv = jnp.dot(kv, wk, preferred_element_type=jnp.float32)         # [2*rows, H]
    pk = pkv[:rows].reshape(tb, m, h)                                 # [TB, M, H]
    pv = pkv[rows:].reshape(tb, m, h)                                 # [TB, M, H]
    pq = jnp.dot(q, wq, preferred_element_type=jnp.float32)           # [TB, H]

    # energy_layer(tanh(q + k)) -> scores in lane-dense row layout [TB, M]
    t = jnp.tanh(pq[:, None, :] + pk)                                 # [TB, M, H]
    scores = jnp.sum(t * we[None, :, :], axis=-1)                     # [TB, M]

    # sequence mask: positions >= memory_length get a large negative value
    lens = lens_ref[...]                                              # [TB, 1]
    pos = lax.broadcasted_iota(jnp.int32, (tb, m), 1)                 # [TB, M]
    scores = jnp.where(pos < lens, scores, jnp.float32(-1e30))

    # softmax along the memory (lane) axis
    s_max = jnp.max(scores, axis=-1, keepdims=True)                   # [TB, 1]
    p = jnp.exp(scores - s_max)                                       # [TB, M]
    denom = jnp.sum(p, axis=-1, keepdims=True)                        # [TB, 1]
    attn = p / denom                                                  # [TB, M]

    # soft retrieval on the MXU: [TB,1,M] @ [TB,M,H] -> [TB,1,H]
    out3 = jnp.einsum('tqm,tmh->tqh', attn[:, None, :], pv,
                      preferred_element_type=jnp.float32)             # [TB, 1, H]

    out_ref[...] = out3[:, 0, :].astype(out_ref.dtype)                # [TB, H]
    attn_ref[...] = attn.astype(attn_ref.dtype)                       # [TB, M]


@functools.partial(jax.jit, static_argnames=("block_b",))
def learned_attention(queries, keys, values, memory_lengths,
                      w_key, w_query, w_energy, block_b=None):
    """Pallas implementation of LearnedAttention.forward.

    queries        : [B, 1, Q]   float32
    keys           : [B, M, K]   float32
    values         : [B, M, K]   float32  (value_dim == key_size, as in the module)
    memory_lengths : [B]         int
    w_key          : [K, H]      (key_layer.weight.T)
    w_query        : [Q, H]      (query_layer.weight.T)
    w_energy       : [1, H]      (energy_layer.weight)

    returns (soft_values_retrieval [B,1,H], attention_weights [B,1,M])
    """
    B, _, Q = queries.shape
    _, M, K = keys.shape
    H = w_key.shape[1]

    # --- choose batch tile TB -------------------------------------------------
    if block_b is None:
        tb = max(1, 64 // M)            # fused projection gets ~2*TB*M >= 128 rows
        if B >= 2:
            tb = min(tb, B // 2)        # keep >= 2 grid steps for v7x megacore
        tb = max(1, min(tb, B))
    else:
        tb = max(1, int(block_b))
    G = pl.cdiv(B, tb)
    B_pad = G * tb

    # --- pad batch to a multiple of TB (padded rows discarded at the end) ------
    pad = B_pad - B
    if pad:
        queries = jnp.pad(queries, ((0, pad), (0, 0), (0, 0)))
        keys = jnp.pad(keys, ((0, pad), (0, 0), (0, 0)))
        values = jnp.pad(values, ((0, pad), (0, 0), (0, 0)))
        memory_lengths = jnp.pad(memory_lengths, ((0, pad),), constant_values=1)

    # --- free XLA reshapes: present lane/sublane-dense blocks to the kernel ----
    lens3 = memory_lengths.astype(jnp.int32).reshape(G, tb, 1)
    q3 = queries.reshape(G, tb, Q)
    k3 = keys.reshape(G, tb * M, K)
    v3 = values.reshape(G, tb * M, K)

    flops = 2 * B_pad * (2 * M * K * H + Q * H + 2 * M * H)
    transcendentals = B_pad * (M * H + M)          # tanh + exp
    bytes_accessed = 4 * (B_pad * (1 + Q + 2 * M * K + H + M) + K * H + Q * H + H)

    out3, attn3 = pl.pallas_call(
        _learned_attention_kernel,
        grid=(G,),
        in_specs=(
            pl.BlockSpec((None, tb, 1), lambda g: (g, 0, 0)),         # lens
            pl.BlockSpec((None, tb, Q), lambda g: (g, 0, 0)),         # queries
            pl.BlockSpec((None, tb * M, K), lambda g: (g, 0, 0)),     # keys
            pl.BlockSpec((None, tb * M, K), lambda g: (g, 0, 0)),     # values
            pl.BlockSpec((K, H), lambda g: (0, 0)),                   # w_key
            pl.BlockSpec((Q, H), lambda g: (0, 0)),                   # w_query
            pl.BlockSpec((1, H), lambda g: (0, 0)),                   # w_energy
        ),
        out_specs=(
            pl.BlockSpec((None, tb, H), lambda g: (g, 0, 0)),         # retrieval
            pl.BlockSpec((None, tb, M), lambda g: (g, 0, 0)),         # attn (row)
        ),
        out_shape=(
            jax.ShapeDtypeStruct((G, tb, H), jnp.float32),
            jax.ShapeDtypeStruct((G, tb, M), jnp.float32),
        ),
        compiler_params=pltpu.CompilerParams(
            dimension_semantics=("parallel",)),
        cost_estimate=pl.CostEstimate(
            flops=flops, transcendentals=transcendentals,
            bytes_accessed=bytes_accessed),
    )(lens3, q3, k3, v3, w_key, w_query, w_energy)

    # free reshapes back to the PyTorch return shapes, drop padding
    out = out3.reshape(B_pad, 1, H)[:B]
    attention_weights = attn3.reshape(B_pad, 1, M)[:B]
    return out, attention_weights


def _reference(queries, keys, values, memory_lengths, w_key, w_query, w_energy):
    """Pure-JAX reference matching the PyTorch module semantics."""
    M = keys.shape[1]
    pk = jnp.einsum('bmk,kh->bmh', keys, w_key)
    pv = jnp.einsum('bmk,kh->bmh', values, w_key)     # values go through key_layer too
    pq = jnp.einsum('bqk,kh->bqh', queries, w_query)
    t = jnp.tanh(pq + pk)                             # [B, M, H]
    s = jnp.einsum('bmh,h->bm', t, w_energy[0])       # [B, M]
    mask = jnp.arange(M)[None, :] < memory_lengths[:, None]
    s = jnp.where(mask, s, -jnp.inf)
    attn = jax.nn.softmax(s, axis=1)                  # [B, M]
    out = jnp.einsum('bm,bmh->bh', attn, pv)          # [B, H]
    return out[:, None, :], attn[:, None, :]


if __name__ == "__main__":
    # Shapes consistent with the module's forward:
    #   batch=2, num_memory=8, key_size==value_dim=16, query_size=24, hidden=32
    B, M, K, Q, H = 2, 8, 16, 24, 32

    key = jax.random.PRNGKey(0)
    ks = jax.random.split(key, 6)

    queries = jax.random.normal(ks[0], (B, 1, Q), dtype=jnp.float32)
    keys_in = jax.random.normal(ks[1], (B, M, K), dtype=jnp.float32)
    values = jax.random.normal(ks[2], (B, M, K), dtype=jnp.float32)
    memory_lengths = jnp.array([M, 5], dtype=jnp.int32)

    # deterministic "nn.Linear(bias=False)"-style weights, stored as [in, out]
    w_key = (jax.random.uniform(ks[3], (K, H), dtype=jnp.float32) - 0.5) * (2.0 / jnp.sqrt(K))
    w_query = (jax.random.uniform(ks[4], (Q, H), dtype=jnp.float32) - 0.5) * (2.0 / jnp.sqrt(Q))
    w_energy = (jax.random.uniform(ks[5], (1, H), dtype=jnp.float32) - 0.5) * (2.0 / jnp.sqrt(H))

    out, attn = learned_attention(queries, keys_in, values, memory_lengths,
                                  w_key, w_query, w_energy)
    jax.block_until_ready((out, attn))

    ref_out, ref_attn = _reference(queries, keys_in, values, memory_lengths,
                                   w_key, w_query, w_energy)
    assert out.shape == (B, 1, H) and attn.shape == (B, 1, M)
    assert jnp.allclose(out, ref_out, atol=1e-3, rtol=1e-3)
    assert jnp.allclose(attn, ref_attn, atol=1e-3, rtol=1e-3)

    # Larger batch: exercises TB > 1 batching and the padding path.
    B2 = 9
    ks2 = jax.random.split(jax.random.PRNGKey(1), 4)
    q2 = jax.random.normal(ks2[0], (B2, 1, Q), dtype=jnp.float32)
    k2 = jax.random.normal(ks2[1], (B2, M, K), dtype=jnp.float32)
    v2 = jax.random.normal(ks2[2], (B2, M, K), dtype=jnp.float32)
    lens2 = jax.random.randint(ks2[3], (B2,), 1, M + 1).astype(jnp.int32)

    out2, attn2 = learned_attention(q2, k2, v2, lens2, w_key, w_query, w_energy)
    jax.block_until_ready((out2, attn2))
    r_out2, r_attn2 = _reference(q2, k2, v2, lens2, w_key, w_query, w_energy)
    assert out2.shape == (B2, 1, H) and attn2.shape == (B2, 1, M)
    assert jnp.allclose(out2, r_out2, atol=1e-3, rtol=1e-3)
    assert jnp.allclose(attn2, r_attn2, atol=1e-3, rtol=1e-3)

    print("KERNEL_OK")
</pallas_src>

<mosaic_0001>
module attributes {stable_mosaic.version = 11 : i64} {
  func.func @_learned_attention_kernel(%arg0: i32, %arg1: memref<1x1x1xi32, #tpu.memory_space<vmem>>, %arg2: memref<1x1x24xf32, #tpu.memory_space<vmem>>, %arg3: memref<1x8x16xf32, #tpu.memory_space<vmem>>, %arg4: memref<1x8x16xf32, #tpu.memory_space<vmem>>, %arg5: memref<16x32xf32, #tpu.memory_space<vmem>>, %arg6: memref<24x32xf32, #tpu.memory_space<vmem>>, %arg7: memref<1x32xf32, #tpu.memory_space<vmem>>, %arg8: memref<1x1x32xf32, #tpu.memory_space<vmem>>, %arg9: memref<1x1x8xf32, #tpu.memory_space<vmem>>) attributes {dimension_semantics = [#tpu.dimension_semantics<parallel>], iteration_bounds = array<i64: 2>, scalar_prefetch = 0 : i64, scratch_operands = 0 : i64, tpu.core_type = #tpu.core_type<tc>, window_params = [{transform_indices = @transform_0, window_bounds = array<i64: 1, 1, 1>}, {transform_indices = @transform_1, window_bounds = array<i64: 1, 1, 24>}, {transform_indices = @transform_2, window_bounds = array<i64: 1, 8, 16>}, {transform_indices = @transform_3, window_bounds = array<i64: 1, 8, 16>}, {pipeline_mode = #tpu.pipeline_mode<synchronous>, transform_indices = @transform_4, window_bounds = array<i64: 16, 32>}, {pipeline_mode = #tpu.pipeline_mode<synchronous>, transform_indices = @transform_5, window_bounds = array<i64: 24, 32>}, {pipeline_mode = #tpu.pipeline_mode<synchronous>, transform_indices = @transform_6, window_bounds = array<i64: 1, 32>}, {transform_indices = @transform_7, window_bounds = array<i64: 1, 1, 32>}, {transform_indices = @transform_8, window_bounds = array<i64: 1, 1, 8>}]} {
    %c0 = arith.constant 0 : index
    %c0_0 = arith.constant 0 : index
    %c0_1 = arith.constant 0 : index
    %0 = vector.load %arg3[%c0, %c0_0, %c0_1] : memref<1x8x16xf32, #tpu.memory_space<vmem>>, vector<1x8x16xf32>
    %1 = vector.shape_cast %0 : vector<1x8x16xf32> to vector<8x16xf32>
    %c0_2 = arith.constant 0 : index
    %c0_3 = arith.constant 0 : index
    %c0_4 = arith.constant 0 : index
    %2 = vector.load %arg4[%c0_2, %c0_3, %c0_4] : memref<1x8x16xf32, #tpu.memory_space<vmem>>, vector<1x8x16xf32>
    %3 = vector.shape_cast %2 : vector<1x8x16xf32> to vector<8x16xf32>
    %c0_5 = arith.constant 0 : index
    %c0_6 = arith.constant 0 : index
    %c0_7 = arith.constant 0 : index
    %4 = vector.load %arg2[%c0_5, %c0_6, %c0_7] : memref<1x1x24xf32, #tpu.memory_space<vmem>>, vector<1x1x24xf32>
    %5 = vector.shape_cast %4 : vector<1x1x24xf32> to vector<1x24xf32>
    %c0_8 = arith.constant 0 : index
    %c0_9 = arith.constant 0 : index
    %6 = vector.load %arg5[%c0_8, %c0_9] : memref<16x32xf32, #tpu.memory_space<vmem>>, vector<16x32xf32>
    %c0_10 = arith.constant 0 : index
    %c0_11 = arith.constant 0 : index
    %7 = vector.load %arg6[%c0_10, %c0_11] : memref<24x32xf32, #tpu.memory_space<vmem>>, vector<24x32xf32>
    %c0_12 = arith.constant 0 : index
    %c0_13 = arith.constant 0 : index
    %8 = vector.load %arg7[%c0_12, %c0_13] : memref<1x32xf32, #tpu.memory_space<vmem>>, vector<1x32xf32>
    %9 = tpu.concatenate %1, %3 in 0 : vector<8x16xf32>, vector<8x16xf32> -> vector<16x16xf32>
    %cst = arith.constant dense<0.000000e+00> : vector<16x32xf32>
    %10 = tpu.matmul %9, %6, %cst {dimension_numbers = #tpu.dot_dimension_numbers<[1], [0], [0], [1], [0, 0, 1, 1], [], []>} : vector<16x16xf32>, vector<16x32xf32>, vector<16x32xf32> -> vector<16x32xf32>
    %11 = vector.extract_strided_slice %10 {offsets = [0, 0], sizes = [8, 32], strides = [1, 1]} : vector<16x32xf32> to vector<8x32xf32>
    %12 = vector.shape_cast %11 : vector<8x32xf32> to vector<1x8x32xf32>
    %13 = vector.extract_strided_slice %10 {offsets = [8, 0], sizes = [8, 32], strides = [1, 1]} : vector<16x32xf32> to vector<8x32xf32>
    %14 = vector.shape_cast %13 : vector<8x32xf32> to vector<1x8x32xf32>
    %cst_14 = arith.constant dense<0.000000e+00> : vector<1x32xf32>
    %15 = tpu.matmul %5, %7, %cst_14 {dimension_numbers = #tpu.dot_dimension_numbers<[1], [0], [0], [1], [0, 0, 1, 1], [], []>} : vector<1x24xf32>, vector<24x32xf32>, vector<1x32xf32> -> vector<1x32xf32>
    %16 = vector.shape_cast %15 : vector<1x32xf32> to vector<1x1x32xf32>
    %17 = vector.broadcast %16 : vector<1x1x32xf32> to vector<1x8x32xf32>
    %18 = arith.addf %17, %12 : vector<1x8x32xf32>
    %19 = math.tanh %18 : vector<1x8x32xf32>
    %20 = vector.shape_cast %8 : vector<1x32xf32> to vector<1x1x32xf32>
    %21 = vector.broadcast %20 : vector<1x1x32xf32> to vector<1x8x32xf32>
    %22 = arith.mulf %19, %21 : vector<1x8x32xf32>
    %cst_15 = arith.constant dense<0.000000e+00> : vector<1x8xf32>
    %23 = vector.multi_reduction <add>, %22, %cst_15 [2] : vector<1x8x32xf32> to vector<1x8xf32>
    %c0_16 = arith.constant 0 : index
    %c0_17 = arith.constant 0 : index
    %c0_18 = arith.constant 0 : index
    %24 = vector.load %arg1[%c0_16, %c0_17, %c0_18] : memref<1x1x1xi32, #tpu.memory_space<vmem>>, vector<1x1x1xi32>
    %25 = vector.shape_cast %24 : vector<1x1x1xi32> to vector<1x1xi32>
    %26 = tpu.iota {dimensions = array<i32: 1>} : vector<1x8xi32>
    %27 = vector.broadcast %25 : vector<1x1xi32> to vector<1x8xi32>
    %28 = arith.cmpi slt, %26, %27 : vector<1x8xi32>
    %cst_19 = arith.constant -1.000000e+30 : f32
    %29 = vector.broadcast %cst_19 : f32 to vector<1x8xf32>
    %30 = arith.select %28, %23, %29 : vector<1x8xi1>, vector<1x8xf32>
    %cst_20 = arith.constant dense<0xFF800000> : vector<1xf32>
    %31 = vector.multi_reduction <maximumf>, %30, %cst_20 [1] : vector<1x8xf32> to vector<1xf32>
    %32 = vector.shape_cast %31 : vector<1xf32> to vector<1x1xf32>
    %33 = vector.broadcast %32 : vector<1x1xf32> to vector<1x8xf32>
    %34 = arith.subf %30, %33 : vector<1x8xf32>
    %35 = math.exp %34 : vector<1x8xf32>
    %cst_21 = arith.constant dense<0.000000e+00> : vector<1xf32>
    %36 = vector.multi_reduction <add>, %35, %cst_21 [1] : vector<1x8xf32> to vector<1xf32>
    %37 = vector.shape_cast %36 : vector<1xf32> to vector<1x1xf32>
    %38 = vector.broadcast %37 : vector<1x1xf32> to vector<1x8xf32>
    %39 = arith.divf %35, %38 : vector<1x8xf32>
    %40 = vector.shape_cast %39 : vector<1x8xf32> to vector<1x1x8xf32>
    "tpu.trace_start"() <{level = 10 : i32, message = "tqm,tmh->tqh"}> : () -> ()
    %cst_22 = arith.constant dense<0.000000e+00> : vector<1x1x32xf32>
    %41 = tpu.matmul %40, %14, %cst_22 {dimension_numbers = #tpu.dot_dimension_numbers<[2], [1], [1], [2], [0, 0, 0, 1, 1, 2], [0], [0]>} : vector<1x1x8xf32>, vector<1x8x32xf32>, vector<1x1x32xf32> -> vector<1x1x32xf32>
    "tpu.trace_stop"() : () -> ()
    %42 = vector.shape_cast %41 : vector<1x1x32xf32> to vector<1x32xf32>
    %c0_23 = arith.constant 0 : index
    %c0_24 = arith.constant 0 : index
    %c0_25 = arith.constant 0 : index
    %43 = vector.load %arg8[%c0_23, %c0_24, %c0_25] : memref<1x1x32xf32, #tpu.memory_space<vmem>>, vector<1x1x32xf32>
    %44 = vector.shape_cast %43 : vector<1x1x32xf32> to vector<1x32xf32>
    %45 = vector.shape_cast %42 : vector<1x32xf32> to vector<1x1x32xf32>
    tpu.vector_store %arg8[%c0_23, %c0_24, %c0_25], %45 {strides = array<i32>} : memref<1x1x32xf32, #tpu.memory_space<vmem>>, vector<1x1x32xf32>,
    %c0_26 = arith.constant 0 : index
    %c0_27 = arith.constant 0 : index
    %c0_28 = arith.constant 0 : index
    %46 = vector.load %arg9[%c0_26, %c0_27, %c0_28] : memref<1x1x8xf32, #tpu.memory_space<vmem>>, vector<1x1x8xf32>
    %47 = vector.shape_cast %46 : vector<1x1x8xf32> to vector<1x8xf32>
    %48 = vector.shape_cast %39 : vector<1x8xf32> to vector<1x1x8xf32>
    tpu.vector_store %arg9[%c0_26, %c0_27, %c0_28], %48 {strides = array<i32>} : memref<1x1x8xf32, #tpu.memory_space<vmem>>, vector<1x1x8xf32>,
    return
  }
  func.func @transform_0(%arg0: i32) -> (i32, i32, i32) {
    %c0_i32 = arith.constant 0 : i32
    %c0_i32_0 = arith.constant 0 : i32
    %c0_i32_1 = arith.constant 0 : i32
    return %arg0, %c0_i32, %c0_i32_0 : i32, i32, i32
  }
  func.func @transform_1(%arg0: i32) -> (i32, i32, i32) {
    %c0_i32 = arith.constant 0 : i32
    %c0_i32_0 = arith.constant 0 : i32
    %c0_i32_1 = arith.constant 0 : i32
    return %arg0, %c0_i32, %c0_i32_0 : i32, i32, i32
  }
  func.func @transform_2(%arg0: i32) -> (i32, i32, i32) {
    %c0_i32 = arith.constant 0 : i32
    %c0_i32_0 = arith.constant 0 : i32
    %c0_i32_1 = arith.constant 0 : i32
    return %arg0, %c0_i32, %c0_i32_0 : i32, i32, i32
  }
  func.func @transform_3(%arg0: i32) -> (i32, i32, i32) {
    %c0_i32 = arith.constant 0 : i32
    %c0_i32_0 = arith.constant 0 : i32
    %c0_i32_1 = arith.constant 0 : i32
    return %arg0, %c0_i32, %c0_i32_0 : i32, i32, i32
  }
  func.func @transform_4(%arg0: i32) -> (i32, i32) {
    %c0_i32 = arith.constant 0 : i32
    %c0_i32_0 = arith.constant 0 : i32
    %c0_i32_1 = arith.constant 0 : i32
    return %c0_i32, %c0_i32_0 : i32, i32
  }
  func.func @transform_5(%arg0: i32) -> (i32, i32) {
    %c0_i32 = arith.constant 0 : i32
    %c0_i32_0 = arith.constant 0 : i32
    %c0_i32_1 = arith.constant 0 : i32
    return %c0_i32, %c0_i32_0 : i32, i32
  }
  func.func @transform_6(%arg0: i32) -> (i32, i32) {
    %c0_i32 = arith.constant 0 : i32
    %c0_i32_0 = arith.constant 0 : i32
    %c0_i32_1 = arith.constant 0 : i32
    return %c0_i32, %c0_i32_0 : i32, i32
  }
  func.func @transform_7(%arg0: i32) -> (i32, i32, i32) {
    %c0_i32 = arith.constant 0 : i32
    %c0_i32_0 = arith.constant 0 : i32
    %c0_i32_1 = arith.constant 0 : i32
    return %arg0, %c0_i32, %c0_i32_0 : i32, i32, i32
  }
  func.func @transform_8(%arg0: i32) -> (i32, i32, i32) {
    %c0_i32 = arith.constant 0 : i32
    %c0_i32_0 = arith.constant 0 : i32
    %c0_i32_1 = arith.constant 0 : i32
    return %arg0, %c0_i32, %c0_i32_0 : i32, i32, i32
  }
}

</mosaic_0001>

<llo_original>
// kernel: learned_attention.1
$region0: #{learned_attention.1}
  #allocation0 [shape = 'u32[]', space=smem, size = 0x4, offset = 0x4, fixed_abs, tag = 'smem constant byte address 0x4 - core index']
  #allocation1 [shape = 'u32[72,128]{1,0:T(1,128)}', space=vmem, size = 0x9000, scoped, tag = 'internal scratch']
  %s0 = inlined_call_operand.vmem [shape: s32[2,1,1], index: 0, kind: input, shape index: {}]
  %s1 = inlined_call_operand.vmem [shape: f32[2,1,24], index: 1, kind: input, shape index: {}]
  %s2 = inlined_call_operand.hbm [shape: f32[2,8,16], index: 2, kind: input, shape index: {}]
  %s3 = inlined_call_operand.hbm [shape: f32[2,8,16], index: 3, kind: input, shape index: {}]
  %s4 = inlined_call_operand.hbm [shape: f32[16,32], index: 4, kind: input, shape index: {}]
  %s5 = inlined_call_operand.hbm [shape: f32[24,32], index: 5, kind: input, shape index: {}]
  %s6 = inlined_call_operand.vmem [shape: f32[1,32], index: 6, kind: input, shape index: {}]
  %s7 = inlined_call_operand.hbm [shape: f32[2,1,32], index: 7, kind: output, shape index: {0}]
  %s8 = inlined_call_operand.hbm [shape: f32[2,1,8], index: 8, kind: output, shape index: {1}]
  %9 = xla_tuple %s7, %s8
  %s10 = sld [smem:[#allocation0]]
  $region85: #{learned_attention.1} parent=0
    _
  %s12 = ssub.s32 1, %s10
  %s13 = scalar_select 0, %s12, %s10
  $region1: #{learned_attention.1} parent=0
    #allocation2 [shape = 'u8[8192]{0}', space=vmem, size = 0x2000, scoped, tag = 'input window, operand 2']
    #allocation3 [shape = 's32[2]{0}', space=sflag, size = 0x8, scoped, tag = 'scoped memory for learned_attention.1']
    #allocation4 [shape = 's32[2]{0}', space=sflag, size = 0x8, scoped, tag = 'scoped memory for learned_attention.1']
    #allocation5 [shape = 'u8[8192]{0}', space=vmem, size = 0x2000, scoped, tag = 'input window, operand 3']
    #allocation6 [shape = 's32[2]{0}', space=sflag, size = 0x8, scoped, tag = 'scoped memory for learned_attention.1']
    #allocation7 [shape = 'u8[8192]{0}', space=vmem, size = 0x2000, scoped, tag = 'input window, operand 4, single buffered']
    #allocation8 [shape = 'u8[12288]{0}', space=vmem, size = 0x3000, scoped, tag = 'input window, operand 5, single buffered']
    #allocation9 [shape = 's32[1]{0}', space=sflag, size = 0x4, scoped, tag = 'scoped memory for learned_attention.1']
    #allocation10 [shape = 'u8[1024]{0}', space=vmem, size = 0x400, scoped, tag = 'output window, operand 0']
    #allocation11 [shape = 'u8[1024]{0}', space=vmem, size = 0x400, scoped, tag = 'output window, operand 1']
    #allocation12 [shape = 's32[2]{0}', space=sflag, size = 0x8, scoped, tag = 'scoped memory for learned_attention.1']
    %14 = vsyncpa [#allocation3], 0
    %s15 = scalar_lea.sflag [#allocation3], 1
    %16 = vsyncpa %s15, 0
    %17 = vsyncpa [#allocation6], 0
    %s18 = scalar_lea.sflag [#allocation6], 1
    %19 = vsyncpa %s18, 0
    %20 = vsyncpa [#allocation9], 0
    %21 = vsyncpa [#allocation4], 0
    %s22 = scalar_lea.sflag [#allocation4], 1
    %23 = vsyncpa %s22, 0
    %24 = vsyncpa [#allocation12], 0
    %s25 = scalar_lea.sflag [#allocation12], 1
    %26 = vsyncpa %s25, 0
    loop: start=0, step=1, limit=4
    $region2: #{learned_attention.1} parent=1 // loop_pre_header
      _
    $region3: #{learned_attention.1} parent=1 // loop_header
      %s28 = sphi 0, %s32
      %p29 = scmp.ge.s32.totalorder %s28, 4
      %s38 = sphi 0, %s40
      %s41 = sphi 0, %s38
      %s42 = sphi 0, %s41
      %s58 = sphi 0, %s42
      %s64 = sphi 0, %s66
      %s67 = sphi 0, %s64
      %s68 = sphi 0, %s67
      %s84 = sphi 0, %s68
      %s90 = sphi 0, %s92
      %s93 = sphi 0, %s90
      %s94 = sphi 0, %s93
      %s110 = sphi 0, %s94
      %s116 = sphi 0, %s118
      %s119 = sphi 0, %s116
      %s120 = sphi 0, %s119
      %s136 = sphi 0, %s120
      %s140 = sphi 0, %s140
      %s142 = sphi 0, %s140
      %s143 = sphi 0, %s142
      %s157 = sphi 0, %s143
      %s161 = sphi 0, %s161
      %s163 = sphi 0, %s161
      %s164 = sphi 0, %s163
      %s178 = sphi 0, %s164
      %s182 = sphi 0, %s182
      %s184 = sphi 0, %s182
      %s185 = sphi 0, %s184
      %s199 = sphi 0, %s185
      %s205 = sphi 0, %s207
      %s208 = sphi 0, %s205
      %s209 = sphi 0, %s208
      %s225 = sphi 0, %s209
      %s231 = sphi 0, %s233
      %s234 = sphi 0, %s231
      %s235 = sphi 0, %s234
      %s251 = sphi 0, %s235
    $region4: #{learned_attention.1} parent=1 // loop_header_branch
      %31 = sbr.rel (%p29) target = $region8
    $region5: #{learned_attention.1} parent=1 // loop_body
      %s33 = ssub.s32 %s28, 1
      %s34 = ssub.s32 %s28, 2
      %s35 = sadd.s32 %s28, 1
      %s36 = ssub.s32 %s28, %s35
      %p37 = scmp.eq.s32.totalorder %s36, 0
      %s39 = sadd.s32 %s38, 1
      %s40 = scalar_select %p37, %s38, %s39
      %p43 = pneg %p37
      %p44 = scmp.eq.s32.totalorder %s28, 1
      %p45 = por %p43, %p44
      %p46 = scmp.ne.s32.totalorder %s38, %s41
      %p47 = scmp.eq.s32.totalorder %s28, 0
      %p48 = por %p46, %p47
      %p49 = scmp.ne.s32.totalorder %s38, %s41
      %p50 = scmp.eq.s32.totalorder %s33, 1
      %p51 = por %p49, %p50
      %p52 = scmp.ne.s32.totalorder %s41, %s42
      %p53 = scmp.eq.s32.totalorder %s33, 0
      %p54 = por %p52, %p53
      %p55 = scmp.ne.s32.totalorder %s41, %s42
      %p56 = scmp.eq.s32.totalorder %s34, 1
      %p57 = por %p55, %p56
      %p59 = scmp.ne.s32.totalorder %s42, %s58
      %p60 = scmp.eq.s32.totalorder %s34, 0
      %p61 = por %p59, %p60
      %s62 = ssub.s32 %s28, %s35
      %p63 = scmp.eq.s32.totalorder %s62, 0
      %s65 = sadd.s32 %s64, 1
      %s66 = scalar_select %p63, %s64, %s65
      %p69 = pneg %p63
      %p70 = scmp.eq.s32.totalorder %s28, 1
      %p71 = por %p69, %p70
      %p72 = scmp.ne.s32.totalorder %s64, %s67
      %p73 = scmp.eq.s32.totalorder %s28, 0
      %p74 = por %p72, %p73
      %p75 = scmp.ne.s32.totalorder %s64, %s67
      %p76 = scmp.eq.s32.totalorder %s33, 1
      %p77 = por %p75, %p76
      %p78 = scmp.ne.s32.totalorder %s67, %s68
      %p79 = scmp.eq.s32.totalorder %s33, 0
      %p80 = por %p78, %p79
      %p81 = scmp.ne.s32.totalorder %s67, %s68
      %p82 = scmp.eq.s32.totalorder %s34, 1
      %p83 = por %p81, %p82
      %p85 = scmp.ne.s32.totalorder %s68, %s84
      %p86 = scmp.eq.s32.totalorder %s34, 0
      %p87 = por %p85, %p86
      %s88 = ssub.s32 %s28, %s35
      %p89 = scmp.eq.s32.totalorder %s88, 0
      %s91 = sadd.s32 %s90, 1
      %s92 = scalar_select %p89, %s90, %s91
      %p95 = pneg %p89
      %p96 = scmp.eq.s32.totalorder %s28, 1
      %p97 = por %p95, %p96
      %p98 = scmp.ne.s32.totalorder %s90, %s93
      %p99 = scmp.eq.s32.totalorder %s28, 0
      %p100 = por %p98, %p99
      %p101 = scmp.ne.s32.totalorder %s90, %s93
      %p102 = scmp.eq.s32.totalorder %s33, 1
      %p103 = por %p101, %p102
      %p104 = scmp.ne.s32.totalorder %s93, %s94
      %p105 = scmp.eq.s32.totalorder %s33, 0
      %p106 = por %p104, %p105
      %p107 = scmp.ne.s32.totalorder %s93, %s94
      %p108 = scmp.eq.s32.totalorder %s34, 1
      %p109 = por %p107, %p108
      %p111 = scmp.ne.s32.totalorder %s94, %s110
      %p112 = scmp.eq.s32.totalorder %s34, 0
      %p113 = por %p111, %p112
      %s114 = ssub.s32 %s28, %s35
      %p115 = scmp.eq.s32.totalorder %s114, 0
      %s117 = sadd.s32 %s116, 1
      %s118 = scalar_select %p115, %s116, %s117
      %p121 = pneg %p115
      %p122 = scmp.eq.s32.totalorder %s28, 1
      %p123 = por %p121, %p122
      %p124 = scmp.ne.s32.totalorder %s116, %s119
      %p125 = scmp.eq.s32.totalorder %s28, 0
      %p126 = por %p124, %p125
      %p127 = scmp.ne.s32.totalorder %s116, %s119
      %p128 = scmp.eq.s32.totalorder %s33, 1
      %p129 = por %p127, %p128
      %p130 = scmp.ne.s32.totalorder %s119, %s120
      %p131 = scmp.eq.s32.totalorder %s33, 0
      %p132 = por %p130, %p131
      %p133 = scmp.ne.s32.totalorder %s119, %s120
      %p134 = scmp.eq.s32.totalorder %s34, 1
      %p135 = por %p133, %p134
      %p137 = scmp.ne.s32.totalorder %s120, %s136
      %p138 = scmp.eq.s32.totalorder %s34, 0
      %p139 = por %p137, %p138
      %s141 = sadd.s32 %s140, 1
      %p144 = scmp.eq.s32.totalorder %s28, 1
      %p145 = scmp.ne.s32.totalorder %s140, %s142
      %p146 = scmp.eq.s32.totalorder %s28, 0
      %p147 = por %p145, %p146
      %p148 = scmp.ne.s32.totalorder %s140, %s142
      %p149 = scmp.eq.s32.totalorder %s33, 1
      %p150 = por %p148, %p149
      %p151 = scmp.ne.s32.totalorder %s142, %s143
      %p152 = scmp.eq.s32.totalorder %s33, 0
      %p153 = por %p151, %p152
      %p154 = scmp.ne.s32.totalorder %s142, %s143
      %p155 = scmp.eq.s32.totalorder %s34, 1
      %p156 = por %p154, %p155
      %p158 = scmp.ne.s32.totalorder %s143, %s157
      %p159 = scmp.eq.s32.totalorder %s34, 0
      %p160 = por %p158, %p159
      %s162 = sadd.s32 %s161, 1
      %p165 = scmp.eq.s32.totalorder %s28, 1
      %p166 = scmp.ne.s32.totalorder %s161, %s163
      %p167 = scmp.eq.s32.totalorder %s28, 0
      %p168 = por %p166, %p167
      %p169 = scmp.ne.s32.totalorder %s161, %s163
      %p170 = scmp.eq.s32.totalorder %s33, 1
      %p171 = por %p169, %p170
      %p172 = scmp.ne.s32.totalorder %s163, %s164
      %p173 = scmp.eq.s32.totalorder %s33, 0
      %p174 = por %p172, %p173
      %p175 = scmp.ne.s32.totalorder %s163, %s164
      %p176 = scmp.eq.s32.totalorder %s34, 1
      %p177 = por %p175, %p176
      %p179 = scmp.ne.s32.totalorder %s164, %s178
      %p180 = scmp.eq.s32.totalorder %s34, 0
      %p181 = por %p179, %p180
      %s183 = sadd.s32 %s182, 1
      %p186 = scmp.eq.s32.totalorder %s28, 1
      %p187 = scmp.ne.s32.totalorder %s182, %s184
      %p188 = scmp.eq.s32.totalorder %s28, 0
      %p189 = por %p187, %p188
      %p190 = scmp.ne.s32.totalorder %s182, %s184
      %p191 = scmp.eq.s32.totalorder %s33, 1
      %p192 = por %p190, %p191
      %p193 = scmp.ne.s32.totalorder %s184, %s185
      %p194 = scmp.eq.s32.totalorder %s33, 0
      %p195 = por %p193, %p194
      %p196 = scmp.ne.s32.totalorder %s184, %s185
      %p197 = scmp.eq.s32.totalorder %s34, 1
      %p198 = por %p196, %p197
      %p200 = scmp.ne.s32.totalorder %s185, %s199
      %p201 = scmp.eq.s32.totalorder %s34, 0
      %p202 = por %p200, %p201
      %s203 = ssub.s32 %s28, %s35
      %p204 = scmp.eq.s32.totalorder %s203, 0
      %s206 = sadd.s32 %s205, 1
      %s207 = scalar_select %p204, %s205, %s206
      %p210 = pneg %p204
      %p211 = scmp.eq.s32.totalorder %s28, 1
      %p212 = por %p210, %p211
      %p213 = scmp.ne.s32.totalorder %s205, %s208
      %p214 = scmp.eq.s32.totalorder %s28, 0
      %p215 = por %p213, %p214
      %p216 = scmp.ne.s32.totalorder %s205, %s208
      %p217 = scmp.eq.s32.totalorder %s33, 1
      %p218 = por %p216, %p217
      %p219 = scmp.ne.s32.totalorder %s208, %s209
      %p220 = scmp.eq.s32.totalorder %s33, 0
      %p221 = por %p219, %p220
      %p222 = scmp.ne.s32.totalorder %s208, %s209
      %p223 = scmp.eq.s32.totalorder %s34, 1
      %p224 = por %p222, %p223
      %p226 = scmp.ne.s32.totalorder %s209, %s225
      %p227 = scmp.eq.s32.totalorder %s34, 0
      %p228 = por %p226, %p227
      %s229 = ssub.s32 %s28, %s35
      %p230 = scmp.eq.s32.totalorder %s229, 0
      %s232 = sadd.s32 %s231, 1
      %s233 = scalar_select %p230, %s231, %s232
      %p236 = pneg %p230
      %p237 = scmp.eq.s32.totalorder %s28, 1
      %p238 = por %p236, %p237
      %p239 = scmp.ne.s32.totalorder %s231, %s234
      %p240 = scmp.eq.s32.totalorder %s28, 0
      %p241 = por %p239, %p240
      %p242 = scmp.ne.s32.totalorder %s231, %s234
      %p243 = scmp.eq.s32.totalorder %s33, 1
      %p244 = por %p242, %p243
      %p245 = scmp.ne.s32.totalorder %s234, %s235
      %p246 = scmp.eq.s32.totalorder %s33, 0
      %p247 = por %p245, %p246
      %p248 = scmp.ne.s32.totalorder %s234, %s235
      %p249 = scmp.eq.s32.totalorder %s34, 1
      %p250 = por %p248, %p249
      %p252 = scmp.ne.s32.totalorder %s235, %s251
      %p253 = scmp.eq.s32.totalorder %s34, 0
      %p254 = por %p252, %p253
      %p255 = scmp.le.s32.totalorder 1, %s28
      %p256 = scmp.lt.s32.totalorder %s28, 3
      %p257 = pnand %p255, %p256
      %p258 = pneg %p257
      // Predicated region
      $region9: #{learned_attention.1} parent=5 // pred_check
        _
      $region10: #{learned_attention.1} parent=5 // pred_check_branch
        %260 = sbr.rel (%p257) target = $region12
      $region11: #{learned_attention.1} parent=5 // pred_region
        %s261 = ssub.s32 %s28, 1
        // Predicated region
        $region13: #{learned_attention.1} parent=11 // pred_check
          %p262 = pneg %p153
        $region14: #{learned_attention.1} parent=11 // pred_check_branch
          %264 = sbr.rel (%p262) target = $region16
        $region15: #{learned_attention.1} parent=11 // pred_region
          %266 = vsyncadd [#allocation6], 0
          %s267 = sshll.u32 %s4, 4
          %s268 = int_to_ptr.hbm [resolvable:$true] %s267
          %s269 = sshll.u32 [#allocation7], 4
          %s270 = int_to_ptr.vmem [resolvable:$true] %s269
          %275 = dma.hbm_to_vmem [thread:$0]  %s268, 256, %s270, [#allocation6], 128, 128, 8
        $region16: #{learned_attention.1} parent=11 // pred_fallthru
          _
        // Predicated region
        $region17: #{learned_attention.1} parent=11 // pred_check
          %p276 = pneg %p174
        $region18: #{learned_attention.1} parent=11 // pred_check_branch
          %278 = sbr.rel (%p276) target = $region20
        $region19: #{learned_attention.1} parent=11 // pred_region
          %280 = vsyncadd [#allocation9], 0
          %s281 = sshll.u32 %s5, 4
          %s282 = int_to_ptr.hbm [resolvable:$true] %s281
          %s283 = sshll.u32 [#allocation8], 4
          %s284 = int_to_ptr.vmem [resolvable:$true] %s283
          %289 = dma.hbm_to_vmem [thread:$0]  %s282, 384, %s284, [#allocation9], 128, 128, 8
        $region20: #{learned_attention.1} parent=11 // pred_fallthru
          _
        // Predicated region
        $region21: #{learned_attention.1} parent=11 // pred_check
          %p290 = pneg %p195
        $region22: #{learned_attention.1} parent=11 // pred_check_branch
          %292 = sbr.rel (%p290) target = $region24
        $region23: #{learned_attention.1} parent=11 // pred_region
          _
        $region24: #{learned_attention.1} parent=11 // pred_fallthru
          _
      $region12: #{learned_attention.1} parent=5 // pred_fallthru
        _
      %p293 = scmp.lt.s32.totalorder %s28, 2
      // Predicated region
      $region25: #{learned_attention.1} parent=5 // pred_check
        %p294 = pneg %p293
      $region26: #{learned_attention.1} parent=5 // pred_check_branch
        %296 = sbr.rel (%p294) target = $region28
      $region27: #{learned_attention.1} parent=5 // pred_region
        // Predicated region
        $region29: #{learned_attention.1} parent=27 // pred_check
          %p297 = pneg %p48
        $region30: #{learned_attention.1} parent=27 // pred_check_branch
          %299 = sbr.rel (%p297) target = $region32
        $region31: #{learned_attention.1} parent=27 // pred_region
          %p300 = scmp.lt.s32.totalorder %s28, 1
          %s301 = scalar_select %p300, %s28, 1
          %s302 = scalar_lea.vmem %s0, %s301
        $region32: #{learned_attention.1} parent=27 // pred_fallthru
          _
        // Predicated region
        $region33: #{learned_attention.1} parent=27 // pred_check
          %p303 = pneg %p74
        $region34: #{learned_attention.1} parent=27 // pred_check_branch
          %305 = sbr.rel (%p303) target = $region36
        $region35: #{learned_attention.1} parent=27 // pred_region
          %p306 = scmp.lt.s32.totalorder %s28, 1
          %s307 = scalar_select %p306, %s28, 1
          %s308 = scalar_lea.vmem %s1, %s307
        $region36: #{learned_attention.1} parent=27 // pred_fallthru
          _
        // Predicated region
        $region37: #{learned_attention.1} parent=27 // pred_check
          %p309 = pneg %p100
        $region38: #{learned_attention.1} parent=27 // pred_check_branch
          %311 = sbr.rel (%p309) target = $region40
        $region39: #{learned_attention.1} parent=27 // pred_region
          %s312 = sand.u32 %s90, 1
          %s313 = scalar_lea.sflag [#allocation3], %s312
          %s314 = sand.u32 %s90, 1
          %s315 = smul.addr %s314, 8
          %s316 = scalar_lea.vmem [#allocation2], %s315
          %318 = vsyncadd %s313, 0
          %s319 = smul.addr %s28, 8
          %s320 = scalar_lea.hbm %s2, %s319
          %s322 = sshll.u32 %s320, 4
          %s323 = int_to_ptr.hbm [resolvable:$true] %s322
          %s324 = sshll.u32 %s316, 4
          %s325 = int_to_ptr.vmem [resolvable:$true] %s324
          %327 = dma.hbm_to_vmem [thread:$0]  %s323, 128, %s325, %s313
        $region40: #{learned_attention.1} parent=27 // pred_fallthru
          _
        // Predicated region
        $region41: #{learned_attention.1} parent=27 // pred_check
          %p328 = pneg %p126
        $region42: #{learned_attention.1} parent=27 // pred_check_branch
          %330 = sbr.rel (%p328) target = $region44
        $region43: #{learned_attention.1} parent=27 // pred_region
          %s331 = sand.u32 %s28, 1
          %s332 = scalar_lea.sflag [#allocation6], %s331
          %s333 = sand.u32 %s116, 1
          %s334 = smul.addr %s333, 8
          %s335 = scalar_lea.vmem [#allocation5], %s334
          %337 = vsyncadd %s332, 0
          %s338 = smul.addr %s28, 8
          %s339 = scalar_lea.hbm %s3, %s338
          %s341 = sshll.u32 %s339, 4
          %s342 = int_to_ptr.hbm [resolvable:$true] %s341
          %s343 = sshll.u32 %s335, 4
          %s344 = int_to_ptr.vmem [resolvable:$true] %s343
          %346 = dma.hbm_to_vmem [thread:$0]  %s342, 128, %s344, %s332
        $region44: #{learned_attention.1} parent=27 // pred_fallthru
          _
      $region28: #{learned_attention.1} parent=5 // pred_fallthru
        _
      %p347 = scmp.le.s32.totalorder 1, %s28
      %p348 = scmp.lt.s32.totalorder %s28, 3
      %p349 = pnand %p347, %p348
      %p350 = pneg %p349
      // Predicated region
      $region45: #{learned_attention.1} parent=5 // pred_check
        _
      $region46: #{learned_attention.1} parent=5 // pred_check_branch
        %352 = sbr.rel (%p349) target = $region48
      $region47: #{learned_attention.1} parent=5 // pred_region
        %s353 = ssub.s32 %s28, 1
        %s354 = sand.u32 %s93, 1
        %s355 = scalar_lea.sflag [#allocation3], %s354
        %s356 = sand.u32 %s93, 1
        %s357 = smul.addr %s356, 8
        %s358 = scalar_lea.vmem [#allocation2], %s357
        // Predicated region
        $region49: #{learned_attention.1} parent=47 // pred_check
          %p359 = pneg %p106
        $region50: #{learned_attention.1} parent=47 // pred_check_branch
          %361 = sbr.rel (%p359) target = $region52
        $region51: #{learned_attention.1} parent=47 // pred_region
          %363 = dma.done %s355, 128
        $region52: #{learned_attention.1} parent=47 // pred_fallthru
          _
        %s364 = sand.u32 %s33, 1
        %s365 = scalar_lea.sflag [#allocation6], %s364
        %s366 = sand.u32 %s119, 1
        %s367 = smul.addr %s366, 8
        %s368 = scalar_lea.vmem [#allocation5], %s367
        // Predicated region
        $region53: #{learned_attention.1} parent=47 // pred_check
          %p369 = pneg %p132
        $region54: #{learned_attention.1} parent=47 // pred_check_branch
          %371 = sbr.rel (%p369) target = $region56
        $region55: #{learned_attention.1} parent=47 // pred_region
          %373 = dma.done %s365, 128
        $region56: #{learned_attention.1} parent=47 // pred_fallthru
          _
        // Predicated region
        $region57: #{learned_attention.1} parent=47 // pred_check
          %p374 = pneg %p153
        $region58: #{learned_attention.1} parent=47 // pred_check_branch
          %376 = sbr.rel (%p374) target = $region60
        $region59: #{learned_attention.1} parent=47 // pred_region
          %378 = dma.done [#allocation6], 256
        $region60: #{learned_attention.1} parent=47 // pred_fallthru
          _
        // Predicated region
        $region61: #{learned_attention.1} parent=47 // pred_check
          %p379 = pneg %p174
        $region62: #{learned_attention.1} parent=47 // pred_check_branch
          %381 = sbr.rel (%p379) target = $region64
        $region63: #{learned_attention.1} parent=47 // pred_region
          %383 = dma.done [#allocation9], 384
        $region64: #{learned_attention.1} parent=47 // pred_fallthru
          _
        %p384 = scmp.lt.s32.totalorder %s33, 1
        %s385 = scalar_select %p384, %s33, 1
        %s386 = scalar_lea.vmem %s0, %s385
        %p387 = pneg %p54
        %p388 = pneg %p51
        %p389 = scmp.lt.s32.totalorder %s33, 1
        %s390 = scalar_select %p389, %s33, 1
        %s391 = scalar_lea.vmem %s1, %s390
        %p392 = pneg %p80
        %p393 = pneg %p77
        %s394 = sand.u32 %s93, 1
        %s395 = scalar_lea.sflag [#allocation3], %s394
        %s396 = sand.u32 %s93, 1
        %s397 = smul.addr %s396, 8
        %s398 = scalar_lea.vmem [#allocation2], %s397
        %p399 = pneg %p106
        %p400 = pneg %p103
        %s401 = sand.u32 %s33, 1
        %s402 = scalar_lea.sflag [#allocation6], %s401
        %s403 = sand.u32 %s119, 1
        %s404 = smul.addr %s403, 8
        %s405 = scalar_lea.vmem [#allocation5], %s404
        %p406 = pneg %p132
        %p407 = pneg %p129
        %p408 = pneg %p153
        %p409 = pneg %p150
        %p410 = pneg %p174
        %p411 = pneg %p171
        %p412 = pneg %p195
        %p413 = pneg %p192
        %p414 = pneg %p221
        %p415 = pneg %p218
        %s416 = sand.u32 %s208, 1
        %s417 = scalar_lea.sflag [#allocation4], %s416
        %s418 = sand.u32 %s208, 1
        %s419 = scalar_lea.vmem [#allocation10], %s418
        %p420 = pneg %p247
        %p421 = pneg %p244
        %s422 = sand.u32 %s234, 1
        %s423 = scalar_lea.sflag [#allocation12], %s422
        %s424 = sand.u32 %s234, 1
        %s425 = scalar_lea.vmem [#allocation11], %s424
        %p426 = scmp.lt.s32.totalorder %s33, 1
        %s427 = scalar_select %p426, %s33, 1
        %s428 = scalar_lea.vmem %s0, %s427
        %p429 = scmp.lt.s32.totalorder %s33, 1
        %s430 = scalar_select %p429, %s33, 1
        %s431 = scalar_lea.vmem %s1, %s430
        %v432 = vld [vmem:[%s358] sm:$0xff]
        %v433 = vld [vmem:[%s368] sm:$0xff]
        %v434 = vld [vmem:[%s431] sm:$0x1]
        %v435 = vld [vmem:[#allocation7] sm:$0xff]
        %v436 = vld [vmem:[#allocation7 + $0x8] sm:$0xff]
        %v437 = vld [vmem:[#allocation8] sm:$0xff]
        %v438 = vld [vmem:[#allocation8 + $0x8] sm:$0xff]
        %v439 = vld [vmem:[#allocation8 + $0x10] sm:$0xff]
        %v440 = vld [vmem:[%s6] sm:$0x1]
        %vm441 = vcmask 130048
        %v443 = vsel %vm441, %v432, 0
        %v446 = vsel %vm441, %v433, 0
        %448 = vmatpush.msra.mxu0 0.0
        %449 = vmatpush.msra.mxu0 0.0
        %450 = vmatpush.msra.mxu0 0.0
        %451 = vmatpush.msra.mxu0 0.0
        %452 = vmatpush.msra.mxu0 0.0
        %453 = vmatpush.msra.mxu0 0.0
        %454 = vmatpush.msra.mxu0 0.0
        %455 = vmatpush.msra.mxu0 0.0
        %456 = vmatpush.msra.mxu0 0.0
        %457 = vmatpush.msra.mxu0 0.0
        %458 = vmatpush.msra.mxu0 0.0
        %459 = vmatpush.msra.mxu0 0.0
        %460 = vmatpush.msra.mxu0 0.0
        %461 = vmatpush.msra.mxu0 0.0
        %462 = vmatpush.msra.mxu0 %v436
        %463 = vmatpush.msra.mxu0 %v435
        %464 = vmatmul.f32.gmra.mxu0 %v443
        %v465 = vpop.f32.mrf.mxu0
        %v466 = vadd.f32 0.0, %v465
        %467 = vmatmul.f32.gmra.mxu0 %v446
        %v468 = vpop.f32.mrf.mxu0
        %v469 = vadd.f32 0.0, %v468
        %470 = vdwg.mxu0
        %vm471 = vcmask 195584
        %v473 = vsel %vm471, %v434, 0
        %475 = vmatpush.msra.mxu0 0.0
        %476 = vmatpush.msra.mxu0 0.0
        %477 = vmatpush.msra.mxu0 0.0
        %478 = vmatpush.msra.mxu0 0.0
        %479 = vmatpush.msra.mxu0 0.0
        %480 = vmatpush.msra.mxu0 0.0
        %481 = vmatpush.msra.mxu0 0.0
        %482 = vmatpush.msra.mxu0 0.0
        %483 = vmatpush.msra.mxu0 0.0
        %484 = vmatpush.msra.mxu0 0.0
        %485 = vmatpush.msra.mxu0 0.0
        %486 = vmatpush.msra.mxu0 0.0
        %487 = vmatpush.msra.mxu0 0.0
        %488 = vmatpush.msra.mxu0 %v439
        %489 = vmatpush.msra.mxu0 %v438
        %490 = vmatpush.msra.mxu0 %v437
        %491 = vmatmul.f32.gmra.mxu0 %v473
        %v492 = vpop.f32.mrf.mxu0
        %v493 = vadd.f32 0.0, %v492
        %494 = vdwg.mxu0
        %v495 = vperm.slane %v493, 0
        %v496 = vadd.f32 %v495, %v466
        %v497 = vtanh.pop %v496
        %v499 = vperm.slane %v440, 0
        %v501 = vmul.f32 %v497, %v499
        %vm502 = vcmask 261120
        %v503 = vsel %vm502, %v501, 0.0
        %504 = vadd.xlane.f32.xlu0 %v503
        %v505 = vpop.xlane.xlu0 %504
        %v506 = vld [vmem:[%s428] sm:$0x1]
        %v507 = vlaneseq
        %v508 = vand.u32 %v507, 127
        %509 = vset.pattern.permute.xlu0 0
        %510 = vperm.xlu0 %509, %v506
        %v511 = vpop.permute.xlu0 %510
        %v512 = vperm.slane %v511, 0
        %vm513 = vcmp.lt.s32.totalorder %v508, %v512
        %v515 = vperm.slane %v505, %v508
        %v517 = vsel %vm513, %v515, -1e+30
        %vm518 = vcmask 57344
        %v519 = vsel %vm518, %v517, -inf
        %520 = vmax.xlane.f32.xlu0 %v519
        %v521 = vpop.xlane.xlu0 %520
        %v522 = vsub.f32 %v517, %v521
        %v523 = vmul.f32 %v522, 1.442695
        %v524 = vpow.pop %v523
        %v525 = vsel %vm518, %v524, 0.0
        %526 = vadd.xlane.f32.xlu0 %v525
        %v527 = vpop.xlane.xlu0 %526
        %v528 = vrcp.pop %v527
        %v529 = vmul.f32 %v527, %v528
        %v530 = vsub.f32 1.0, %v529
        %v531 = vmul.f32 %v528, %v530
        %v532 = vadd.f32 %v528, %v531
        %vm533 = vweird.f32 %v527
        %vm534 = vweird.f32 %v528
        %vm535 = vmor %vm533, %vm534
        %v536 = vsel %vm535, %v528, %v532
        %v537 = vand.u32 2147483647, %v527
        %vm538 = vcmp.eq.f32.partialorder %v537, 8.507059e+37
        %v539 = vand.u32 %v527, 2147483648
        %v540 = vor.u32 1.1754944e-38, %v539
        %v541 = vsel %vm538, %v540, %v536
        %v542 = vmul.f32 %v524, %v541
        %vm543 = vcmask 64512
        %v545 = vsel %vm543, %v542, 0
        %547 = vmatpush.msra.mxu0 0.0
        %548 = vmatpush.msra.mxu0 0.0
        %549 = vmatpush.msra.mxu0 0.0
        %550 = vmatpush.msra.mxu0 0.0
        %551 = vmatpush.msra.mxu0 0.0
        %552 = vmatpush.msra.mxu0 0.0
        %553 = vmatpush.msra.mxu0 0.0
        %554 = vmatpush.msra.mxu0 0.0
        %555 = vmatpush.msra.mxu0 0.0
        %556 = vmatpush.msra.mxu0 0.0
        %557 = vmatpush.msra.mxu0 0.0
        %558 = vmatpush.msra.mxu0 0.0
        %559 = vmatpush.msra.mxu0 0.0
        %560 = vmatpush.msra.mxu0 0.0
        %561 = vmatpush.msra.mxu0 0.0
        %562 = vmatpush.msra.mxu0 %v469
        %563 = vmatmul.f32.gmra.mxu0 %v545
        %v564 = vpop.f32.mrf.mxu0
        %v565 = vadd.f32 0.0, %v564
        %566 = vdwg.mxu0
        %vm567 = vcmask 253952
        %568 = vst.msk [vmem:[%s419] sm:$0x1] %vm567, %v565
        %569 = vst.msk [vmem:[%s425] sm:$0x1] %vm518, %v542
        %s570 = sand.u32 %s208, 1
        %s571 = scalar_lea.sflag [#allocation4], %s570
        %s572 = sand.u32 %s208, 1
        %s573 = scalar_lea.vmem [#allocation10], %s572
        %s574 = sand.u32 %s234, 1
        %s575 = scalar_lea.sflag [#allocation12], %s574
        %s576 = sand.u32 %s234, 1
        %s577 = scalar_lea.vmem [#allocation11], %s576
        // Predicated region
        $region65: #{learned_attention.1} parent=47 // pred_check
          %p578 = pneg %p218
        $region66: #{learned_attention.1} parent=47 // pred_check_branch
          %580 = sbr.rel (%p578) target = $region68
        $region67: #{learned_attention.1} parent=47 // pred_region
          %582 = vsyncadd %s571, 0
          %s583 = scalar_lea.hbm %s7, %s33
          %s585 = sshll.u32 %s573, 4
          %s586 = int_to_ptr.vmem [resolvable:$true] %s585
          %s587 = sshll.u32 %s583, 4
          %s588 = int_to_ptr.hbm [resolvable:$true] %s587
          %590 = dma.vmem_to_hbm [thread:$0]  %s586, 16, %s588, %s571
        $region68: #{learned_attention.1} parent=47 // pred_fallthru
          _
        // Predicated region
        $region69: #{learned_attention.1} parent=47 // pred_check
          %p591 = pneg %p244
        $region70: #{learned_attention.1} parent=47 // pred_check_branch
          %593 = sbr.rel (%p591) target = $region72
        $region71: #{learned_attention.1} parent=47 // pred_region
          %595 = vsyncadd %s575, 0
          %s596 = scalar_lea.hbm %s8, %s33
          %s598 = sshll.u32 %s577, 4
          %s599 = int_to_ptr.vmem [resolvable:$true] %s598
          %s600 = sshll.u32 %s596, 4
          %s601 = int_to_ptr.hbm [resolvable:$true] %s600
          %603 = dma.vmem_to_hbm [thread:$0]  %s599, 16, %s601, %s575
        $region72: #{learned_attention.1} parent=47 // pred_fallthru
          _
      $region48: #{learned_attention.1} parent=5 // pred_fallthru
        _
      %p604 = scmp.le.s32.totalorder 2, %s28
      // Predicated region
      $region73: #{learned_attention.1} parent=5 // pred_check
        %p605 = pneg %p604
      $region74: #{learned_attention.1} parent=5 // pred_check_branch
        %607 = sbr.rel (%p605) target = $region76
      $region75: #{learned_attention.1} parent=5 // pred_region
        %s608 = ssub.s32 %s28, 2
        // Predicated region
        $region77: #{learned_attention.1} parent=75 // pred_check
          %p609 = pneg %p224
        $region78: #{learned_attention.1} parent=75 // pred_check_branch
          %611 = sbr.rel (%p609) target = $region80
        $region79: #{learned_attention.1} parent=75 // pred_region
          %s612 = sand.u32 %s209, 1
          %s613 = scalar_lea.sflag [#allocation4], %s612
          %s614 = sand.u32 %s209, 1
          %s615 = scalar_lea.vmem [#allocation10], %s614
          %617 = dma.done %s613, 16
        $region80: #{learned_attention.1} parent=75 // pred_fallthru
          _
        // Predicated region
        $region81: #{learned_attention.1} parent=75 // pred_check
          %p618 = pneg %p250
        $region82: #{learned_attention.1} parent=75 // pred_check_branch
          %620 = sbr.rel (%p618) target = $region84
        $region83: #{learned_attention.1} parent=75 // pred_region
          %s621 = sand.u32 %s235, 1
          %s622 = scalar_lea.sflag [#allocation12], %s621
          %s623 = sand.u32 %s235, 1
          %s624 = scalar_lea.vmem [#allocation11], %s623
          %626 = dma.done %s622, 16
        $region84: #{learned_attention.1} parent=75 // pred_fallthru
          _
      $region76: #{learned_attention.1} parent=5 // pred_fallthru
        _
    $region6: #{learned_attention.1} parent=1 // loop_footer
      %s32 = sadd.s32 1, %s28
    $region7: #{learned_attention.1} parent=1 // loop_footer_branch
      %27 = sbr.rel target = $region3
    $region8: #{learned_attention.1} parent=1 // loop_exit
      _
    %627 = vsyncpa [#allocation3], 1
    %s628 = scalar_lea.sflag [#allocation3], 1
    %629 = vsyncpa %s628, 1
    %630 = vsyncpa [#allocation6], 1
    %s631 = scalar_lea.sflag [#allocation6], 1
    %632 = vsyncpa %s631, 1
    %633 = vsyncpa [#allocation9], 1
    %634 = vsyncpa [#allocation4], 1
    %s635 = scalar_lea.sflag [#allocation4], 1
    %636 = vsyncpa %s635, 1
    %637 = vsyncpa [#allocation12], 1
    %s638 = scalar_lea.sflag [#allocation12], 1
    %639 = vsyncpa %s638, 1

</llo_original>
